<compile_context>
chip_gen: v5e
topology: v5e:2x2
jax: 0.10.0
libtpu: 0.0.40
codegen_flags: <defaults>
</compile_context>

<pallas_src>
import functools

import jax
import jax.numpy as jnp
from jax.experimental import pallas as pl
from jax.experimental.pallas import tpu as pltpu


def _round_up(value, multiple):
    return ((value + multiple - 1) // multiple) * multiple


def _vmem_budget_bytes():
    """Per-generation scoped-VMEM ceiling (headroom below physical VMEM)."""
    try:
        cap = int(pltpu.get_tpu_info().vmem_capacity_bytes)   # 128 MiB v5e/v6e, 64 MiB v7x
    except Exception:
        cap = 64 << 20                                        # safe on every generation
    return max(32 << 20, min(cap - (16 << 20), 96 << 20))


def _stats_kernel(bidx_ref, x_ref, inv_ref, w_ref, b_ref, ms_ref,
                  scale_ref, shift_ref, *, n_valid):
    """Phase 1: accumulate per-graph sum(x)/sum(x*x) in the resident output
    blocks, then fold them into per-graph scale/shift at the last node tile."""
    t = pl.program_id(1)                       # node-tile axis ("arbitrary", innermost)
    tile_n = x_ref.shape[0]
    num_graphs = scale_ref.shape[0]

    @pl.when(t == 0)
    def _init():
        scale_ref[...] = jnp.zeros_like(scale_ref)   # running sum(x)
        shift_ref[...] = jnp.zeros_like(shift_ref)   # running sum(x*x)

    # x is NOT padded in the wrapper: rows past n_valid of the ragged last tile
    # hold unspecified HBM data.  Zero them so NaN/Inf garbage can't poison the
    # matmul (a 0 mask coefficient alone would still give 0 * NaN = NaN).
    x = x_ref[...].astype(jnp.float32)                       # [tile_n, d_tile]
    row = jax.lax.broadcasted_iota(jnp.int32, (tile_n, 1), 0)
    x = jnp.where(row < (n_valid - t * tile_n), x, 0.0)

    # In-tile one-hot segment mask; the dense [B, N] matrix never exists in HBM.
    # Padded node slots carry the sentinel id == B -> all-zero mask column.
    bidx = bidx_ref[...]                                     # [1, tile_n] int32 (lanes)
    gid = jax.lax.broadcasted_iota(jnp.int32, (num_graphs, tile_n), 0)
    mask = (gid == bidx).astype(jnp.float32)                 # [B, tile_n]

    scale_ref[...] += jnp.dot(mask, x, preferred_element_type=jnp.float32)
    shift_ref[...] += jnp.dot(mask, x * x, preferred_element_type=jnp.float32)

    @pl.when(t == pl.num_programs(1) - 1)
    def _finalize():
        inv = inv_ref[...]                                   # [B, 1]  1 / node count
        w = w_ref[...]                                       # [1, d_tile] f32
        b = b_ref[...]
        ms = ms_ref[...]
        mean = scale_ref[...] * inv                          # [B, d_tile]
        ex2 = shift_ref[...] * inv
        # var of (x - ms*mean) from raw moments:
        #   E[x^2] - (2 - ms)*ms*mean^2 ; clamp guards f32 cancellation.
        var = jnp.maximum(ex2 - (2.0 - ms) * ms * (mean * mean), 0.0)
        sc = w * jax.lax.rsqrt(var + 1e-6)                   # EUP rsqrt on tiny tile
        scale_ref[...] = sc
        shift_ref[...] = b - ms * mean * sc


def _apply_kernel(bidx_ref, x_ref, scale_ref, shift_ref, o_ref):
    """Phase 2: out = x * scale[graph(node)] + shift[graph(node)]."""
    tile_n = x_ref.shape[0]
    num_graphs = scale_ref.shape[0]
    bidx = bidx_ref[...]                                     # [tile_n, 1] int32
    gid = jax.lax.broadcasted_iota(jnp.int32, (tile_n, num_graphs), 1)
    mask = (gid == bidx).astype(jnp.float32)                 # [tile_n, B]
    scale_n = jnp.dot(mask, scale_ref[...], preferred_element_type=jnp.float32)
    shift_n = jnp.dot(mask, shift_ref[...], preferred_element_type=jnp.float32)
    x = x_ref[...].astype(jnp.float32)
    # Ragged last tile: sentinel bidx rows get 0 scale/shift; any NaN from the
    # unspecified x rows lands only in out-of-bounds rows, whose writes Pallas masks.
    o_ref[...] = (x * scale_n + shift_n).astype(o_ref.dtype)


def graph_norm_dgl(tensor, batch_list, weight, bias, mean_scale, *, tile_n=None):
    """GraphNormDGL 'gn' forward.
    tensor: [N, D] node features (any float dtype, streamed natively);
    batch_list: [B] int graph sizes (graphs contiguous along the node axis)."""
    N, D = tensor.shape
    B = batch_list.shape[0]
    x_dtype = tensor.dtype
    x_item = jnp.dtype(x_dtype).itemsize

    # Tiny [*, D] params: f32 here is negligible HBM traffic.
    w = weight.reshape(1, D).astype(jnp.float32)
    b = bias.reshape(1, D).astype(jnp.float32)
    ms = mean_scale.reshape(1, D).astype(jnp.float32)
    # Guard against zero-node graphs (would otherwise produce inf/NaN).
    inv_counts = (1.0 / jnp.maximum(batch_list, 1).astype(jnp.float32)).reshape(B, 1)

    # ---- feature-axis tiling: gives phase 1 a "parallel" axis (v7x megacore) ----
    if D > 128 and D % 128 == 0:
        d_tile = 256 if (D % 256 == 0 and D >= 512) else 128
    else:
        d_tile = D                       # D < 128: natural layout kept (see TODO above)
    d_tiles = D // d_tile

    budget = _vmem_budget_bytes()
    b8 = _round_up(B, 8)

    def _p2_vmem(t):                     # phase 2 is the VMEM-heavier call
        return (2 * t * d_tile * x_item              # x blocks (double buffered)
                + 2 * t * d_tile * x_item            # out blocks
                + 2 * t * 128 * 4                    # (t, 1) int32 bidx, lane-padded to 128
                + 4 * b8 * d_tile * 4)               # scale/shift blocks

    # ---- node-axis tiling: size by bytes (~2 MiB of x per tile), keep a
    #      multiple of 128 (lane-layout bidx block), stay inside the VMEM budget.
    if tile_n is None:
        tile_n = max(128, ((2 << 20) // max(1, d_tile * x_item)) // 128 * 128)
        while tile_n > 128 and _p2_vmem(tile_n) > (budget * 3) // 5:
            tile_n -= 128
        tile_n = min(tile_n, _round_up(N, 128))
    else:
        tile_n = max(8, _round_up(int(tile_n), 8))
    if tile_n >= N:
        tile_n = _round_up(N, 8)         # single ragged tile covers all nodes
    elif tile_n % 128 != 0:
        tile_n = _round_up(tile_n, 128)  # multi-tile lane-layout bidx needs %128
    n_tiles = pl.cdiv(N, tile_n)
    n_pad = n_tiles * tile_n

    # Only batch_index (tiny int32) is padded; x / out are never copied in HBM.
    batch_index = jnp.repeat(jnp.arange(B, dtype=jnp.int32), batch_list,
                             total_repeat_length=N)
    if n_pad != N:
        batch_index = jnp.pad(batch_index, (0, n_pad - N), constant_values=B)
    bidx_row = batch_index.reshape(1, n_pad)     # lane layout    -> phase-1 masks
    bidx_col = batch_index.reshape(n_pad, 1)     # sublane layout -> phase-2 masks

    grid = (d_tiles, n_tiles)

    def _limit(nbytes):
        return int(min(budget, max(32 << 20, 2 * nbytes)))

    # --- phase 1: per-graph folded affine params (scale, shift) ----------------
    p1_bytes = (2 * tile_n * d_tile * x_item
                + 2 * 8 * tile_n * 4                 # (1, tile_n) bidx (sublane-padded)
                + 2 * 2 * b8 * d_tile * 4            # resident scale/shift blocks
                + 2 * (3 * 8 * d_tile + b8 * 128) * 4)   # w/b/ms + inv_counts blocks
    scale, shift = pl.pallas_call(
        functools.partial(_stats_kernel, n_valid=N),
        out_shape=(jax.ShapeDtypeStruct((B, D), jnp.float32),
                   jax.ShapeDtypeStruct((B, D), jnp.float32)),
        grid_spec=pltpu.PrefetchScalarGridSpec(
            num_scalar_prefetch=0,
            grid=grid,
            in_specs=[
                pl.BlockSpec((1, tile_n), lambda d, i: (0, i)),       # batch ids (lanes)
                pl.BlockSpec((tile_n, d_tile), lambda d, i: (i, d)),  # x (native dtype)
                pl.BlockSpec((B, 1), lambda d, i: (0, 0)),            # 1 / node count
                pl.BlockSpec((1, d_tile), lambda d, i: (0, d)),       # weight
                pl.BlockSpec((1, d_tile), lambda d, i: (0, d)),       # bias
                pl.BlockSpec((1, d_tile), lambda d, i: (0, d)),       # mean_scale
            ],
            out_specs=[
                pl.BlockSpec((B, d_tile), lambda d, i: (0, d)),       # scale (resident acc)
                pl.BlockSpec((B, d_tile), lambda d, i: (0, d)),       # shift (resident acc)
            ],
        ),
        compiler_params=pltpu.CompilerParams(
            dimension_semantics=("parallel", "arbitrary"),
            vmem_limit_bytes=_limit(p1_bytes)),
        cost_estimate=pl.CostEstimate(
            flops=4 * N * B * D + 12 * B * D,
            transcendentals=B * D,
            bytes_accessed=N * D * x_item + d_tiles * n_pad * 4 + 2 * B * D * 4),
    )(bidx_row, tensor, inv_counts, w, b, ms)

    # --- phase 2: out = x * scale[g] + shift[g], stored in the input dtype -----
    out = pl.pallas_call(
        _apply_kernel,
        out_shape=jax.ShapeDtypeStruct((N, D), x_dtype),
        grid_spec=pltpu.PrefetchScalarGridSpec(
            num_scalar_prefetch=0,
            grid=grid,
            in_specs=[
                pl.BlockSpec((tile_n, 1), lambda d, i: (i, 0)),       # batch ids (sublanes)
                pl.BlockSpec((tile_n, d_tile), lambda d, i: (i, d)),  # x (native dtype)
                pl.BlockSpec((B, d_tile), lambda d, i: (0, d)),       # scale
                pl.BlockSpec((B, d_tile), lambda d, i: (0, d)),       # shift
            ],
            out_specs=pl.BlockSpec((tile_n, d_tile), lambda d, i: (i, d)),
        ),
        compiler_params=pltpu.CompilerParams(
            dimension_semantics=("parallel", "parallel"),
            vmem_limit_bytes=_limit(_p2_vmem(tile_n))),
        cost_estimate=pl.CostEstimate(
            flops=4 * N * B * D + 2 * N * D,
            transcendentals=0,
            bytes_accessed=2 * N * D * x_item + n_pad * 4 + 2 * B * D * 4),
    )(bidx_col, tensor, scale, shift)

    return out


def _reference(x, batch_list, weight, bias, mean_scale):
    """Pure-JAX reference of the PyTorch GraphNormDGL 'gn' math."""
    N = x.shape[0]
    B = batch_list.shape[0]
    xf = x.astype(jnp.float32)
    bidx = jnp.repeat(jnp.arange(B), batch_list, total_repeat_length=N)
    counts = jnp.maximum(batch_list, 1).astype(jnp.float32)[:, None]
    mean = jax.ops.segment_sum(xf, bidx, num_segments=B) / counts
    sub = xf - mean[bidx] * mean_scale
    std = jnp.sqrt(jax.ops.segment_sum(sub * sub, bidx, num_segments=B) / counts + 1e-6)
    return weight * sub / std[bidx] + bias


if __name__ == "__main__":
    key = jax.random.PRNGKey(0)

    # Case 1: module-default params (ones / zeros / ones), two tiny graphs,
    # single (ragged-free) node tile, D < 128 natural layout.
    hidden_dim = 32
    batch_list = jnp.array([10, 6], dtype=jnp.int32)
    N = int(batch_list.sum())
    k0, k1 = jax.random.split(key)
    x = jax.random.normal(k0, (N, hidden_dim), dtype=jnp.float32)
    weight = jnp.ones((hidden_dim,), jnp.float32)
    bias = jnp.zeros((hidden_dim,), jnp.float32)
    mean_scale = jnp.ones((hidden_dim,), jnp.float32)

    out = graph_norm_dgl(x, batch_list, weight, bias, mean_scale)
    jax.block_until_ready(out)
    ref = _reference(x, batch_list, weight, bias, mean_scale)
    assert out.shape == (N, hidden_dim) and out.dtype == x.dtype
    assert bool(jnp.allclose(out, ref, atol=1e-3, rtol=1e-3)), "case 1 mismatch"

    # Case 2: forced multi-node-tile grid with a ragged last tile (300 = 2*128 + 44),
    # non-trivial learned params; exercises sentinel bidx + in-kernel row masking
    # + cross-tile accumulation in the resident output blocks.
    batch_list2 = jnp.array([37, 64, 26, 101, 72], dtype=jnp.int32)
    N2 = int(batch_list2.sum())
    k2, k3, k4, k5, k6 = jax.random.split(k1, 5)
    x2 = jax.random.normal(k2, (N2, hidden_dim), dtype=jnp.float32) * 2.0 + 0.5
    weight2 = 1.0 + 0.1 * jax.random.normal(k3, (hidden_dim,), dtype=jnp.float32)
    bias2 = 0.1 * jax.random.normal(k4, (hidden_dim,), dtype=jnp.float32)
    mean_scale2 = 1.0 + 0.1 * jax.random.normal(k5, (hidden_dim,), dtype=jnp.float32)

    out2 = graph_norm_dgl(x2, batch_list2, weight2, bias2, mean_scale2, tile_n=128)
    jax.block_until_ready(out2)
    ref2 = _reference(x2, batch_list2, weight2, bias2, mean_scale2)
    assert out2.shape == (N2, hidden_dim)
    assert bool(jnp.allclose(out2, ref2, atol=1e-3, rtol=1e-3)), "case 2 mismatch"

    # Case 3: D = 256 -> two 128-wide feature tiles on the leading "parallel"
    # grid axis (v7x megacore path) combined with a ragged multi-tile node grid.
    hidden_dim3 = 256
    batch_list3 = jnp.array([100, 80, 120], dtype=jnp.int32)
    N3 = int(batch_list3.sum())
    k7, k8, k9, k10 = jax.random.split(k6, 4)
    x3 = jax.random.normal(k7, (N3, hidden_dim3), dtype=jnp.float32) * 1.5 - 0.25
    weight3 = 1.0 + 0.1 * jax.random.normal(k8, (hidden_dim3,), dtype=jnp.float32)
    bias3 = 0.1 * jax.random.normal(k9, (hidden_dim3,), dtype=jnp.float32)
    mean_scale3 = 1.0 + 0.1 * jax.random.normal(k10, (hidden_dim3,), dtype=jnp.float32)

    out3 = graph_norm_dgl(x3, batch_list3, weight3, bias3, mean_scale3, tile_n=128)
    jax.block_until_ready(out3)
    ref3 = _reference(x3, batch_list3, weight3, bias3, mean_scale3)
    assert out3.shape == (N3, hidden_dim3)
    assert bool(jnp.allclose(out3, ref3, atol=1e-3, rtol=1e-3)), "case 3 mismatch"

    print("KERNEL_OK")
</pallas_src>

<mosaic_0001>
module attributes {stable_mosaic.version = 11 : i64} {
  func.func @_stats_kernel(%arg0: i32, %arg1: i32, %arg2: memref<1x16xi32, #tpu.memory_space<vmem>>, %arg3: memref<16x32xf32, #tpu.memory_space<vmem>>, %arg4: memref<2x1xf32, #tpu.memory_space<vmem>>, %arg5: memref<1x32xf32, #tpu.memory_space<vmem>>, %arg6: memref<1x32xf32, #tpu.memory_space<vmem>>, %arg7: memref<1x32xf32, #tpu.memory_space<vmem>>, %arg8: memref<2x32xf32, #tpu.memory_space<vmem>>, %arg9: memref<2x32xf32, #tpu.memory_space<vmem>>) attributes {dimension_semantics = [#tpu.dimension_semantics<parallel>, #tpu.dimension_semantics<arbitrary>], iteration_bounds = array<i64: 1, 1>, scalar_prefetch = 0 : i64, scratch_operands = 0 : i64, tpu.core_type = #tpu.core_type<tc>, window_params = [{transform_indices = @transform_0, window_bounds = array<i64: 1, 16>}, {transform_indices = @transform_1, window_bounds = array<i64: 16, 32>}, {pipeline_mode = #tpu.pipeline_mode<synchronous>, transform_indices = @transform_2, window_bounds = array<i64: 2, 1>}, {transform_indices = @transform_3, window_bounds = array<i64: 1, 32>}, {transform_indices = @transform_4, window_bounds = array<i64: 1, 32>}, {transform_indices = @transform_5, window_bounds = array<i64: 1, 32>}, {transform_indices = @transform_6, window_bounds = array<i64: 2, 32>}, {transform_indices = @transform_7, window_bounds = array<i64: 2, 32>}]} {
    %c0_i32 = arith.constant 0 : i32
    %0 = arith.cmpi eq, %arg1, %c0_i32 : i32
    %1 = arith.extui %0 : i1 to i32
    %c0_i32_0 = arith.constant 0 : i32
    %2 = arith.cmpi ne, %1, %c0_i32_0 : i32
    scf.if %2 {
      %cst_17 = arith.constant 0.000000e+00 : f32
      %31 = vector.broadcast %cst_17 : f32 to vector<2x32xf32>
      %c0_18 = arith.constant 0 : index
      %c0_19 = arith.constant 0 : index
      %32 = vector.load %arg8[%c0_18, %c0_19] : memref<2x32xf32, #tpu.memory_space<vmem>>, vector<2x32xf32>
      tpu.vector_store %arg8[%c0_18, %c0_19], %31 {strides = array<i32>} : memref<2x32xf32, #tpu.memory_space<vmem>>, vector<2x32xf32>,
      %cst_20 = arith.constant 0.000000e+00 : f32
      %33 = vector.broadcast %cst_20 : f32 to vector<2x32xf32>
      %c0_21 = arith.constant 0 : index
      %c0_22 = arith.constant 0 : index
      %34 = vector.load %arg9[%c0_21, %c0_22] : memref<2x32xf32, #tpu.memory_space<vmem>>, vector<2x32xf32>
      tpu.vector_store %arg9[%c0_21, %c0_22], %33 {strides = array<i32>} : memref<2x32xf32, #tpu.memory_space<vmem>>, vector<2x32xf32>,
    } else {
    }
    %c0 = arith.constant 0 : index
    %c0_1 = arith.constant 0 : index
    %3 = vector.load %arg3[%c0, %c0_1] : memref<16x32xf32, #tpu.memory_space<vmem>>, vector<16x32xf32>
    %4 = tpu.iota {dimensions = array<i32: 0>} : vector<16x1xi32>
    %c16_i32 = arith.constant 16 : i32
    %5 = arith.muli %arg1, %c16_i32 : i32
    %c16_i32_2 = arith.constant 16 : i32
    %6 = arith.subi %c16_i32_2, %5 : i32
    %7 = vector.broadcast %6 : i32 to vector<16x1xi32>
    %8 = arith.cmpi slt, %4, %7 : vector<16x1xi32>
    %cst = arith.constant 0.000000e+00 : f32
    %9 = vector.shape_cast %8 : vector<16x1xi1> to vector<16x1xi1>
    %10 = vector.broadcast %9 : vector<16x1xi1> to vector<16x32xi1>
    %11 = vector.broadcast %cst : f32 to vector<16x32xf32>
    %12 = arith.select %10, %3, %11 : vector<16x32xi1>, vector<16x32xf32>
    %c0_3 = arith.constant 0 : index
    %c0_4 = arith.constant 0 : index
    %13 = vector.load %arg2[%c0_3, %c0_4] : memref<1x16xi32, #tpu.memory_space<vmem>>, vector<1x16xi32>
    %14 = tpu.iota {dimensions = array<i32: 0>} : vector<2x16xi32>
    %15 = vector.broadcast %13 : vector<1x16xi32> to vector<2x16xi32>
    %16 = arith.cmpi eq, %14, %15 : vector<2x16xi32>
    %17 = arith.extui %16 : vector<2x16xi1> to vector<2x16xi32>
    %18 = arith.sitofp %17 : vector<2x16xi32> to vector<2x16xf32>
    %c0_5 = arith.constant 0 : index
    %c0_6 = arith.constant 0 : index
    %19 = vector.load %arg8[%c0_5, %c0_6] : memref<2x32xf32, #tpu.memory_space<vmem>>, vector<2x32xf32>
    %cst_7 = arith.constant dense<0.000000e+00> : vector<2x32xf32>
    %20 = tpu.matmul %18, %12, %cst_7 {dimension_numbers = #tpu.dot_dimension_numbers<[1], [0], [0], [1], [0, 0, 1, 1], [], []>} : vector<2x16xf32>, vector<16x32xf32>, vector<2x32xf32> -> vector<2x32xf32>
    %21 = arith.addf %19, %20 : vector<2x32xf32>
    %c0_8 = arith.constant 0 : index
    %c0_9 = arith.constant 0 : index
    %22 = vector.load %arg8[%c0_8, %c0_9] : memref<2x32xf32, #tpu.memory_space<vmem>>, vector<2x32xf32>
    tpu.vector_store %arg8[%c0_8, %c0_9], %21 {strides = array<i32>} : memref<2x32xf32, #tpu.memory_space<vmem>>, vector<2x32xf32>,
    %c0_10 = arith.constant 0 : index
    %c0_11 = arith.constant 0 : index
    %23 = vector.load %arg9[%c0_10, %c0_11] : memref<2x32xf32, #tpu.memory_space<vmem>>, vector<2x32xf32>
    %24 = arith.mulf %12, %12 : vector<16x32xf32>
    %cst_12 = arith.constant dense<0.000000e+00> : vector<2x32xf32>
    %25 = tpu.matmul %18, %24, %cst_12 {dimension_numbers = #tpu.dot_dimension_numbers<[1], [0], [0], [1], [0, 0, 1, 1], [], []>} : vector<2x16xf32>, vector<16x32xf32>, vector<2x32xf32> -> vector<2x32xf32>
    %26 = arith.addf %23, %25 : vector<2x32xf32>
    %c0_13 = arith.constant 0 : index
    %c0_14 = arith.constant 0 : index
    %27 = vector.load %arg9[%c0_13, %c0_14] : memref<2x32xf32, #tpu.memory_space<vmem>>, vector<2x32xf32>
    tpu.vector_store %arg9[%c0_13, %c0_14], %26 {strides = array<i32>} : memref<2x32xf32, #tpu.memory_space<vmem>>, vector<2x32xf32>,
    %c0_i32_15 = arith.constant 0 : i32
    %28 = arith.cmpi eq, %arg1, %c0_i32_15 : i32
    %29 = arith.extui %28 : i1 to i32
    %c0_i32_16 = arith.constant 0 : i32
    %30 = arith.cmpi ne, %29, %c0_i32_16 : i32
    scf.if %30 {
      %c0_17 = arith.constant 0 : index
      %c0_18 = arith.constant 0 : index
      %31 = vector.load %arg4[%c0_17, %c0_18] : memref<2x1xf32, #tpu.memory_space<vmem>>, vector<2x1xf32>
      %c0_19 = arith.constant 0 : index
      %c0_20 = arith.constant 0 : index
      %32 = vector.load %arg5[%c0_19, %c0_20] : memref<1x32xf32, #tpu.memory_space<vmem>>, vector<1x32xf32>
      %c0_21 = arith.constant 0 : index
      %c0_22 = arith.constant 0 : index
      %33 = vector.load %arg6[%c0_21, %c0_22] : memref<1x32xf32, #tpu.memory_space<vmem>>, vector<1x32xf32>
      %c0_23 = arith.constant 0 : index
      %c0_24 = arith.constant 0 : index
      %34 = vector.load %arg7[%c0_23, %c0_24] : memref<1x32xf32, #tpu.memory_space<vmem>>, vector<1x32xf32>
      %c0_25 = arith.constant 0 : index
      %c0_26 = arith.constant 0 : index
      %35 = vector.load %arg8[%c0_25, %c0_26] : memref<2x32xf32, #tpu.memory_space<vmem>>, vector<2x32xf32>
      %36 = vector.broadcast %31 : vector<2x1xf32> to vector<2x32xf32>
      %37 = arith.mulf %35, %36 : vector<2x32xf32>
      %c0_27 = arith.constant 0 : index
      %c0_28 = arith.constant 0 : index
      %38 = vector.load %arg9[%c0_27, %c0_28] : memref<2x32xf32, #tpu.memory_space<vmem>>, vector<2x32xf32>
      %39 = vector.broadcast %31 : vector<2x1xf32> to vector<2x32xf32>
      %40 = arith.mulf %38, %39 : vector<2x32xf32>
      %cst_29 = arith.constant 2.000000e+00 : f32
      %41 = vector.broadcast %cst_29 : f32 to vector<1x32xf32>
      %42 = arith.subf %41, %34 : vector<1x32xf32>
      %43 = arith.mulf %42, %34 : vector<1x32xf32>
      %44 = arith.mulf %37, %37 : vector<2x32xf32>
      %45 = vector.broadcast %43 : vector<1x32xf32> to vector<2x32xf32>
      %46 = arith.mulf %45, %44 : vector<2x32xf32>
      %47 = arith.subf %40, %46 : vector<2x32xf32>
      %cst_30 = arith.constant 0.000000e+00 : f32
      %48 = vector.broadcast %cst_30 : f32 to vector<2x32xf32>
      %49 = arith.maximumf %47, %48 : vector<2x32xf32>
      %cst_31 = arith.constant 9.99999997E-7 : f32
      %50 = vector.broadcast %cst_31 : f32 to vector<2x32xf32>
      %51 = arith.addf %49, %50 : vector<2x32xf32>
      %52 = math.rsqrt %51 : vector<2x32xf32>
      %53 = vector.broadcast %32 : vector<1x32xf32> to vector<2x32xf32>
      %54 = arith.mulf %53, %52 : vector<2x32xf32>
      %c0_32 = arith.constant 0 : index
      %c0_33 = arith.constant 0 : index
      %55 = vector.load %arg8[%c0_32, %c0_33] : memref<2x32xf32, #tpu.memory_space<vmem>>, vector<2x32xf32>
      tpu.vector_store %arg8[%c0_32, %c0_33], %54 {strides = array<i32>} : memref<2x32xf32, #tpu.memory_space<vmem>>, vector<2x32xf32>,
      %56 = vector.broadcast %34 : vector<1x32xf32> to vector<2x32xf32>
      %57 = arith.mulf %56, %37 : vector<2x32xf32>
      %58 = arith.mulf %57, %54 : vector<2x32xf32>
      %59 = vector.broadcast %33 : vector<1x32xf32> to vector<2x32xf32>
      %60 = arith.subf %59, %58 : vector<2x32xf32>
      %c0_34 = arith.constant 0 : index
      %c0_35 = arith.constant 0 : index
      %61 = vector.load %arg9[%c0_34, %c0_35] : memref<2x32xf32, #tpu.memory_space<vmem>>, vector<2x32xf32>
      tpu.vector_store %arg9[%c0_34, %c0_35], %60 {strides = array<i32>} : memref<2x32xf32, #tpu.memory_space<vmem>>, vector<2x32xf32>,
    } else {
    }
    return
  }
  func.func @transform_0(%arg0: i32, %arg1: i32) -> (i32, i32) {
    %c0_i32 = arith.constant 0 : i32
    %c0_i32_0 = arith.constant 0 : i32
    return %c0_i32, %arg1 : i32, i32
  }
  func.func @transform_1(%arg0: i32, %arg1: i32) -> (i32, i32) {
    %c0_i32 = arith.constant 0 : i32
    return %arg1, %arg0 : i32, i32
  }
  func.func @transform_2(%arg0: i32, %arg1: i32) -> (i32, i32) {
    %c0_i32 = arith.constant 0 : i32
    %c0_i32_0 = arith.constant 0 : i32
    %c0_i32_1 = arith.constant 0 : i32
    return %c0_i32, %c0_i32_0 : i32, i32
  }
  func.func @transform_3(%arg0: i32, %arg1: i32) -> (i32, i32) {
    %c0_i32 = arith.constant 0 : i32
    %c0_i32_0 = arith.constant 0 : i32
    return %c0_i32, %arg0 : i32, i32
  }
  func.func @transform_4(%arg0: i32, %arg1: i32) -> (i32, i32) {
    %c0_i32 = arith.constant 0 : i32
    %c0_i32_0 = arith.constant 0 : i32
    return %c0_i32, %arg0 : i32, i32
  }
  func.func @transform_5(%arg0: i32, %arg1: i32) -> (i32, i32) {
    %c0_i32 = arith.constant 0 : i32
    %c0_i32_0 = arith.constant 0 : i32
    return %c0_i32, %arg0 : i32, i32
  }
  func.func @transform_6(%arg0: i32, %arg1: i32) -> (i32, i32) {
    %c0_i32 = arith.constant 0 : i32
    %c0_i32_0 = arith.constant 0 : i32
    return %c0_i32, %arg0 : i32, i32
  }
  func.func @transform_7(%arg0: i32, %arg1: i32) -> (i32, i32) {
    %c0_i32 = arith.constant 0 : i32
    %c0_i32_0 = arith.constant 0 : i32
    return %c0_i32, %arg0 : i32, i32
  }
}

</mosaic_0001>

<llo_original>
// kernel: tpu_custom_call.1
$region0: #{tpu_custom_call.1}
  #allocation0 [shape = 'u32[]', space=smem, size = 0x4, offset = 0x4, fixed_abs, tag = 'smem constant byte address 0x4 - core index']
  #allocation1 [shape = 'u32[72,128]{1,0:T(1,128)}', space=vmem, size = 0x9000, scoped, tag = 'internal scratch']
  %s0 = inlined_call_operand.vmem [shape: s32[1,16], index: 0, kind: input, shape index: {}]
  %s1 = inlined_call_operand.hbm [shape: f32[16,32], index: 1, kind: input, shape index: {}]
  %s2 = inlined_call_operand.vmem [shape: f32[2,1], index: 2, kind: input, shape index: {}]
  %s3 = inlined_call_operand.vmem [shape: f32[1,32], index: 3, kind: input, shape index: {}]
  %s4 = inlined_call_operand.vmem [shape: f32[1,32], index: 4, kind: input, shape index: {}]
  %s5 = inlined_call_operand.vmem [shape: f32[1,32], index: 5, kind: input, shape index: {}]
  %s6 = inlined_call_operand.hbm [shape: f32[2,32], index: 6, kind: output, shape index: {0}]
  %s7 = inlined_call_operand.hbm [shape: f32[2,32], index: 7, kind: output, shape index: {1}]
  %8 = xla_tuple %s6, %s7
  %s9 = sld [smem:[#allocation0]]
  $region54: #{tpu_custom_call.1} parent=0
    _
  %s11 = ssub.s32 1, %s9
  %s12 = scalar_select 0, %s11, %s9
  $region1: #{tpu_custom_call.1} parent=0
    #allocation2 [shape = 'u8[8192]{0}', space=vmem, size = 0x2000, scoped, tag = 'input window, operand 1, single buffered']
    #allocation3 [shape = 's32[1]{0}', space=sflag, size = 0x4, scoped, tag = 'scoped memory for tpu_custom_call.1']
    #allocation4 [shape = 's32[1]{0}', space=sflag, size = 0x4, scoped, tag = 'scoped memory for tpu_custom_call.1']
    #allocation5 [shape = 'u8[1024]{0}', space=vmem, size = 0x400, scoped, tag = 'output window, operand 0, single buffered']
    #allocation6 [shape = 'u8[1024]{0}', space=vmem, size = 0x400, scoped, tag = 'output window, operand 1, single buffered']
    #allocation7 [shape = 's32[1]{0}', space=sflag, size = 0x4, scoped, tag = 'scoped memory for tpu_custom_call.1']
    %13 = vsyncpa [#allocation3], 0
    %14 = vsyncpa [#allocation4], 0
    %15 = vsyncpa [#allocation7], 0
    // Predicated region
    $region2: #{tpu_custom_call.1} parent=1 // pred_check
      _
    $region3: #{tpu_custom_call.1} parent=1 // pred_check_branch
      %17 = sbr.rel (0) target = $region5
    $region4: #{tpu_custom_call.1} parent=1 // pred_region
      _
    $region5: #{tpu_custom_call.1} parent=1 // pred_fallthru
      _
    // Predicated region
    $region6: #{tpu_custom_call.1} parent=1 // pred_check
      _
    $region7: #{tpu_custom_call.1} parent=1 // pred_check_branch
      %19 = sbr.rel (0) target = $region9
    $region8: #{tpu_custom_call.1} parent=1 // pred_region
      %21 = vsyncadd [#allocation3], 0
      %s22 = sshll.u32 %s1, 4
      %s23 = int_to_ptr.hbm [resolvable:$true] %s22
      %s24 = sshll.u32 [#allocation2], 4
      %s25 = int_to_ptr.vmem [resolvable:$true] %s24
      %30 = dma.hbm_to_vmem [thread:$0]  %s23, 256, %s25, [#allocation3], 128, 128, 8
    $region9: #{tpu_custom_call.1} parent=1 // pred_fallthru
      _
    // Predicated region
    $region10: #{tpu_custom_call.1} parent=1 // pred_check
      _
    $region11: #{tpu_custom_call.1} parent=1 // pred_check_branch
      %32 = sbr.rel (0) target = $region13
    $region12: #{tpu_custom_call.1} parent=1 // pred_region
      _
    $region13: #{tpu_custom_call.1} parent=1 // pred_fallthru
      _
    // Predicated region
    $region14: #{tpu_custom_call.1} parent=1 // pred_check
      _
    $region15: #{tpu_custom_call.1} parent=1 // pred_check_branch
      %34 = sbr.rel (0) target = $region17
    $region16: #{tpu_custom_call.1} parent=1 // pred_region
      _
    $region17: #{tpu_custom_call.1} parent=1 // pred_fallthru
      _
    // Predicated region
    $region18: #{tpu_custom_call.1} parent=1 // pred_check
      _
    $region19: #{tpu_custom_call.1} parent=1 // pred_check_branch
      %36 = sbr.rel (0) target = $region21
    $region20: #{tpu_custom_call.1} parent=1 // pred_region
      _
    $region21: #{tpu_custom_call.1} parent=1 // pred_fallthru
      _
    // Predicated region
    $region22: #{tpu_custom_call.1} parent=1 // pred_check
      _
    $region23: #{tpu_custom_call.1} parent=1 // pred_check_branch
      %38 = sbr.rel (0) target = $region25
    $region24: #{tpu_custom_call.1} parent=1 // pred_region
      _
    $region25: #{tpu_custom_call.1} parent=1 // pred_fallthru
      _
    // Predicated region
    $region26: #{tpu_custom_call.1} parent=1 // pred_check
      _
    $region27: #{tpu_custom_call.1} parent=1 // pred_check_branch
      %40 = sbr.rel (0) target = $region29
    $region28: #{tpu_custom_call.1} parent=1 // pred_region
      %42 = dma.done [#allocation3], 256
    $region29: #{tpu_custom_call.1} parent=1 // pred_fallthru
      _
    %p43 = scmp.eq.s32.totalorder 0, 0
    // Predicated region
    $region30: #{tpu_custom_call.1} parent=1 // pred_check
      %p44 = pneg %p43
    $region31: #{tpu_custom_call.1} parent=1 // pred_check_branch
      %46 = sbr.rel (%p44) target = $region33
    $region32: #{tpu_custom_call.1} parent=1 // pred_region
      %vm47 = vcmask 254976
      %48 = vst.msk [vmem:[#allocation5] sm:$0x3] %vm47, 0.0
      %49 = vst.msk [vmem:[#allocation6] sm:$0x3] %vm47, 0.0
    $region33: #{tpu_custom_call.1} parent=1 // pred_fallthru
      _
    %v50 = vld [vmem:[#allocation2] sm:$0xff]
    %v51 = vld [vmem:[#allocation2 + $0x8] sm:$0xff]
    %v52 = vlaneseq
    %v53 = vshrl.u32 %v52, 7
    %v54 = vadd.s32 %v53, 8
    %s55 = smul.u32 0, 16
    %s56 = ssub.s32 16, %s55
    %v57 = vstv %s56
    %vm58 = vcmp.lt.s32.totalorder %v53, %v57
    %vm59 = vcmp.lt.s32.totalorder %v54, %v57
    %v60 = vsel %vm58, 1, 0
    %v61 = vsel %vm59, 1, 0
    %vm62 = vcmp.eq.s32.totalorder %v60, 1
    %vm63 = vcmp.eq.s32.totalorder %v61, 1
    %v64 = vsel %vm62, %v50, 0.0
    %v65 = vsel %vm63, %v51, 0.0
    %v66 = vld [vmem:[%s0] sm:$0x1]
    %v67 = vperm.slane %v66, 0
    %vm68 = vcmp.eq.s32.totalorder %v53, %v67
    %v69 = vsel %vm68, 1, 0
    %v70 = vcvt.s32.f32 %v69
    %v71 = vld [vmem:[#allocation5] sm:$0x3]
    %vm72 = vcmask 130048
    %v74 = vsel %vm72, %v70, 0
    %76 = vmatpush.msra.mxu0 0.0
    %77 = vmatpush.msra.mxu0 0.0
    %78 = vmatpush.msra.mxu0 0.0
    %79 = vmatpush.msra.mxu0 0.0
    %80 = vmatpush.msra.mxu0 0.0
    %81 = vmatpush.msra.mxu0 0.0
    %82 = vmatpush.msra.mxu0 0.0
    %83 = vmatpush.msra.mxu0 0.0
    %84 = vmatpush.msra.mxu0 0.0
    %85 = vmatpush.msra.mxu0 0.0
    %86 = vmatpush.msra.mxu0 0.0
    %87 = vmatpush.msra.mxu0 0.0
    %88 = vmatpush.msra.mxu0 0.0
    %89 = vmatpush.msra.mxu0 0.0
    %90 = vmatpush.msra.mxu0 %v65
    %91 = vmatpush.msra.mxu0 %v64
    %92 = vmatmul.f32.gmra.mxu0 %v74
    %v93 = vpop.f32.mrf.mxu0
    %v94 = vadd.f32 0.0, %v93
    %95 = vdwg.mxu0
    %v96 = vadd.f32 %v71, %v94
    %vm97 = vcmask 254976
    %98 = vst.msk [vmem:[#allocation5] sm:$0x3] %vm97, %v96
    %v99 = vld [vmem:[#allocation6] sm:$0x3]
    %v100 = vmul.f32 %v64, %v64
    %v101 = vmul.f32 %v65, %v65
    %102 = vmatpush.msra.mxu0 0.0
    %103 = vmatpush.msra.mxu0 0.0
    %104 = vmatpush.msra.mxu0 0.0
    %105 = vmatpush.msra.mxu0 0.0
    %106 = vmatpush.msra.mxu0 0.0
    %107 = vmatpush.msra.mxu0 0.0
    %108 = vmatpush.msra.mxu0 0.0
    %109 = vmatpush.msra.mxu0 0.0
    %110 = vmatpush.msra.mxu0 0.0
    %111 = vmatpush.msra.mxu0 0.0
    %112 = vmatpush.msra.mxu0 0.0
    %113 = vmatpush.msra.mxu0 0.0
    %114 = vmatpush.msra.mxu0 0.0
    %115 = vmatpush.msra.mxu0 0.0
    %116 = vmatpush.msra.mxu0 %v101
    %117 = vmatpush.msra.mxu0 %v100
    %118 = vmatmul.f32.gmra.mxu0 %v74
    %v119 = vpop.f32.mrf.mxu0
    %v120 = vadd.f32 0.0, %v119
    %121 = vdwg.mxu0
    %v122 = vadd.f32 %v99, %v120
    %123 = vst.msk [vmem:[#allocation6] sm:$0x3] %vm97, %v122
    // Predicated region
    $region34: #{tpu_custom_call.1} parent=1 // pred_check
      %p124 = pneg %p43
    $region35: #{tpu_custom_call.1} parent=1 // pred_check_branch
      %126 = sbr.rel (%p124) target = $region37
    $region36: #{tpu_custom_call.1} parent=1 // pred_region
      %v127 = vld [vmem:[%s2] sm:$0x3]
      %v128 = vld [vmem:[%s3] sm:$0x1]
      %v129 = vld [vmem:[%s4] sm:$0x1]
      %v130 = vld [vmem:[%s5] sm:$0x1]
      %v131 = vld [vmem:[#allocation5] sm:$0x3]
      %133 = vset.pattern.permute.xlu0 0
      %134 = vperm.xlu0 %133, %v127
      %v135 = vpop.permute.xlu0 %134
      %v137 = vmul.f32 %v131, %v135
      %v138 = vld [vmem:[#allocation6] sm:$0x3]
      %v139 = vmul.f32 %v138, %v135
      %v140 = vsub.f32 2.0, %v130
      %v141 = vmul.f32 %v140, %v130
      %v142 = vmul.f32 %v137, %v137
      %v144 = vperm.slane %v141, 0
      %v146 = vmul.f32 %v144, %v142
      %v147 = vsub.f32 %v139, %v146
      %v148 = vmax.f32 %v147, 0.0
      %v149 = vadd.f32 %v148, 1e-06
      %v150 = vrsqrt.pop %v149
      %v151 = vmul.f32 %v150, %v149
      %v152 = vmul.f32 %v151, %v150
      %v153 = vmul.f32 0.5, %v152
      %v154 = vsub.f32 1.5, %v153
      %v155 = vmul.f32 %v150, %v154
      %vm156 = vweird.f32 %v149
      %vm157 = vweird.f32 %v150
      %vm158 = vmor %vm156, %vm157
      %v159 = vsel %vm158, %v150, %v155
      %v161 = vperm.slane %v128, 0
      %v163 = vmul.f32 %v161, %v159
      %164 = vst.msk [vmem:[#allocation5] sm:$0x3] %vm97, %v163
      %v166 = vperm.slane %v130, 0
      %v168 = vmul.f32 %v166, %v137
      %v169 = vmul.f32 %v168, %v163
      %v171 = vperm.slane %v129, 0
      %v173 = vsub.f32 %v171, %v169
      %174 = vst.msk [vmem:[#allocation6] sm:$0x3] %vm97, %v173
    $region37: #{tpu_custom_call.1} parent=1 // pred_fallthru
      _
    // Predicated region
    $region38: #{tpu_custom_call.1} parent=1 // pred_check
      _
    $region39: #{tpu_custom_call.1} parent=1 // pred_check_branch
      %176 = sbr.rel (0) target = $region41
    $region40: #{tpu_custom_call.1} parent=1 // pred_region
      %178 = vsyncadd [#allocation4], 0
      %s180 = sshll.u32 [#allocation5], 4
      %s181 = int_to_ptr.vmem [resolvable:$true] %s180
      %s182 = sshll.u32 %s6, 4
      %s183 = int_to_ptr.hbm [resolvable:$true] %s182
      %185 = dma.vmem_to_hbm [thread:$0]  %s181, 32, %s183, [#allocation4]
    $region41: #{tpu_custom_call.1} parent=1 // pred_fallthru
      _
    // Predicated region
    $region42: #{tpu_custom_call.1} parent=1 // pred_check
      _
    $region43: #{tpu_custom_call.1} parent=1 // pred_check_branch
      %187 = sbr.rel (0) target = $region45
    $region44: #{tpu_custom_call.1} parent=1 // pred_region
      %189 = vsyncadd [#allocation7], 0
      %s191 = sshll.u32 [#allocation6], 4
      %s192 = int_to_ptr.vmem [resolvable:$true] %s191
      %s193 = sshll.u32 %s7, 4
      %s194 = int_to_ptr.hbm [resolvable:$true] %s193
      %196 = dma.vmem_to_hbm [thread:$0]  %s192, 32, %s194, [#allocation7]
    $region45: #{tpu_custom_call.1} parent=1 // pred_fallthru
      _
    // Predicated region
    $region46: #{tpu_custom_call.1} parent=1 // pred_check
      _
    $region47: #{tpu_custom_call.1} parent=1 // pred_check_branch
      %198 = sbr.rel (0) target = $region49
    $region48: #{tpu_custom_call.1} parent=1 // pred_region
      %200 = dma.done [#allocation4], 32
    $region49: #{tpu_custom_call.1} parent=1 // pred_fallthru
      _
    // Predicated region
    $region50: #{tpu_custom_call.1} parent=1 // pred_check
      _
    $region51: #{tpu_custom_call.1} parent=1 // pred_check_branch
      %202 = sbr.rel (0) target = $region53
    $region52: #{tpu_custom_call.1} parent=1 // pred_region
      %204 = dma.done [#allocation7], 32
    $region53: #{tpu_custom_call.1} parent=1 // pred_fallthru
      _
    %205 = vsyncpa [#allocation3], 1
    %206 = vsyncpa [#allocation4], 1
    %207 = vsyncpa [#allocation7], 1

</llo_original>
